<compile_context>
chip_gen: v7x
topology: tpu7x:2x2x1
jax: 0.10.0
libtpu: 0.0.40
codegen_flags: <defaults>
</compile_context>

<pallas_src>
import math
import functools

import jax
import jax.numpy as jnp
from jax import lax
from jax.experimental import pallas as pl
from jax.experimental.pallas import tpu as pltpu


def _mhsa_kernel(x_ref, wqkv_ref, bqkv_ref, wp_ref, bp_ref, mask_ref, o_ref,
                 *, n_heads: int, head_dim: int):
    E = n_heads * head_dim

    x = x_ref[0]                                           # (S, E) bf16

    # Fused QKV projection across all heads: (S, E) @ (E, 3E), fp32 acc on MXU.
    qkv = jnp.dot(x, wqkv_ref[...],
                  preferred_element_type=jnp.float32) + bqkv_ref[...]

    # 1/sqrt(Dh) is already baked into the q columns of wqkv / bqkv.
    q = qkv[:, :E].astype(jnp.bfloat16)
    k = qkv[:, E:2 * E].astype(jnp.bfloat16)
    v = qkv[:, 2 * E:].astype(jnp.bfloat16)

    mask = mask_ref[...]                                   # (S, S) additive f32

    ys = []
    for h in range(n_heads):
        sl = slice(h * head_dim, (h + 1) * head_dim)
        qh, kh, vh = q[:, sl], k[:, sl], v[:, sl]

        # scores = q @ k^T without materializing a transpose (contract Dh).
        s = lax.dot_general(qh, kh,
                            dimension_numbers=(((1,), (1,)), ((), ())),
                            preferred_element_type=jnp.float32) + mask

        # Numerically-stable softmax; divide goes to the EUP via approx recip.
        m = jnp.max(s, axis=-1, keepdims=True)
        e = jnp.exp(s - m)
        p = e * pl.reciprocal(jnp.sum(e, axis=-1, keepdims=True), approx=True)

        # Per-head context: (S, S) @ (S, Dh)
        ys.append(jnp.dot(p.astype(jnp.bfloat16), vh,
                          preferred_element_type=jnp.float32))

    # Head-major concat -> (S, E), lane-dense.
    y = jnp.concatenate(ys, axis=-1).astype(jnp.bfloat16)

    # Single deferred output projection with full contraction depth K = E.
    out = jnp.dot(y, wp_ref[...],
                  preferred_element_type=jnp.float32) + bp_ref[...]
    o_ref[0] = out.astype(o_ref.dtype)


def pack_mhsa_params(wq, bq, wk, bk, wv, bv, wp, bp, *, n_heads, block_size):
    """Pack PyTorch-layout weights once (call at parameter-load time).

    PyTorch nn.Linear: y = x @ W.T + b, with W of shape (out, in).
    The 1/sqrt(head_dim) attention scale is baked into Wq / bq.
    """
    E = wq.shape[0]
    assert E % n_heads == 0
    Dh = E // n_heads
    scale = 1.0 / math.sqrt(Dh)

    wqkv = jnp.concatenate([wq.T * scale, wk.T, wv.T],
                           axis=1).astype(jnp.bfloat16)            # (E, 3E)
    bqkv = jnp.concatenate([bq * scale, bk, bv]
                           ).reshape(1, 3 * E).astype(jnp.float32)  # (1, 3E)
    wp_t = wp.T.astype(jnp.bfloat16)                                # (E, E)
    bp2 = bp.reshape(1, E).astype(jnp.float32)                      # (1, E)

    # Precomputed additive causal mask (0 on/below diagonal, -1e30 above).
    tri = jnp.tril(jnp.ones((block_size, block_size), bool))
    mask = jnp.where(tri, 0.0, -1e30).astype(jnp.float32)

    return dict(wqkv=wqkv, bqkv=bqkv, wp=wp_t, bp=bp2, mask=mask,
                n_heads=n_heads, head_dim=Dh)


def _round_up(n, m):
    return ((n + m - 1) // m) * m


def _vmem_limit_bytes(S, E, out_itemsize):
    def tile(r, c, itemsize):
        return _round_up(r, 8) * _round_up(c, 128) * itemsize

    resident = (tile(E, 3 * E, 2)            # wqkv (bf16)
                + tile(1, 3 * E, 4)          # bqkv
                + tile(E, E, 2)              # wp (bf16)
                + tile(1, E, 4)              # bp
                + tile(S, S, 4))             # additive mask
    streamed = 2 * (tile(S, E, 2) + tile(S, E, out_itemsize))   # x + out (dbuf)
    work = (tile(S, 3 * E, 4)                # qkv fp32
            + 4 * tile(S, S, 4)              # score / exp temporaries
            + 2 * tile(S, E, 4))             # y / out temporaries
    est = resident + streamed + work
    # Leave headroom; never request more than 48 MiB (v7x has 64 MiB / TC).
    return int(min(max(2 * est, 16 << 20), 48 << 20))


def mh_self_attention(x, packed):
    """x: (B, S, E) -> (B, S, E). `packed` comes from pack_mhsa_params."""
    B, S, E = x.shape
    n_heads = packed["n_heads"]
    Dh = packed["head_dim"]
    assert E == n_heads * Dh
    out_dtype = x.dtype

    x_bf = x.astype(jnp.bfloat16)
    mask = packed["mask"][:S, :S]

    kernel = functools.partial(_mhsa_kernel, n_heads=n_heads, head_dim=Dh)

    return pl.pallas_call(
        kernel,
        out_shape=jax.ShapeDtypeStruct((B, S, E), out_dtype),
        grid_spec=pltpu.PrefetchScalarGridSpec(
            num_scalar_prefetch=0,
            grid=(B,),
            in_specs=[
                pl.BlockSpec((1, S, E), lambda b: (b, 0, 0)),        # x
                pl.BlockSpec((E, 3 * E), lambda b: (0, 0)),          # Wqkv (resident)
                pl.BlockSpec((1, 3 * E), lambda b: (0, 0)),          # bqkv (resident)
                pl.BlockSpec((E, E), lambda b: (0, 0)),              # Wp   (resident)
                pl.BlockSpec((1, E), lambda b: (0, 0)),              # bp   (resident)
                pl.BlockSpec((S, S), lambda b: (0, 0)),              # mask (resident)
            ],
            out_specs=pl.BlockSpec((1, S, E), lambda b: (b, 0, 0)),
        ),
        compiler_params=pltpu.CompilerParams(
            dimension_semantics=("parallel",),
            vmem_limit_bytes=_vmem_limit_bytes(S, E, jnp.dtype(out_dtype).itemsize),
        ),
    )(x_bf, packed["wqkv"], packed["bqkv"], packed["wp"], packed["bp"], mask)


def _reference(x, wq, bq, wk, bk, wv, bv, wp, bp, n_heads):
    B, S, E = x.shape
    Dh = E // n_heads

    def lin(x, w, b):
        return jnp.einsum('bse,oe->bso', x, w) + b

    q = lin(x, wq, bq).reshape(B, S, n_heads, Dh).transpose(0, 2, 1, 3)
    k = lin(x, wk, bk).reshape(B, S, n_heads, Dh).transpose(0, 2, 1, 3)
    v = lin(x, wv, bv).reshape(B, S, n_heads, Dh).transpose(0, 2, 1, 3)
    attn = jnp.einsum('bhqd,bhkd->bhqk', q, k) / math.sqrt(Dh)
    m = jnp.tril(jnp.ones((S, S), bool))
    attn = jnp.where(m, attn, -jnp.inf)
    attn = jax.nn.softmax(attn, axis=-1)
    y = jnp.einsum('bhqk,bhkd->bhqd', attn, v)
    y = y.transpose(0, 2, 1, 3).reshape(B, S, E)
    return lin(y, wp, bp)


if __name__ == "__main__":
    # small config consistent with the module: n_embd=32, n_heads=4, S=8
    B, S, E, H = 2, 8, 32, 4
    BLOCK_SIZE = S

    key = jax.random.PRNGKey(0)
    keys = jax.random.split(key, 9)
    x = jax.random.normal(keys[0], (B, S, E), jnp.float32)
    # deterministic parameter init (PyTorch layout: weight (out, in), bias (out,))
    scale = 1.0 / math.sqrt(E)
    wq = jax.random.uniform(keys[1], (E, E), jnp.float32, -scale, scale)
    wk = jax.random.uniform(keys[2], (E, E), jnp.float32, -scale, scale)
    wv = jax.random.uniform(keys[3], (E, E), jnp.float32, -scale, scale)
    wp = jax.random.uniform(keys[4], (E, E), jnp.float32, -scale, scale)
    bq = jax.random.uniform(keys[5], (E,), jnp.float32, -scale, scale)
    bk = jax.random.uniform(keys[6], (E,), jnp.float32, -scale, scale)
    bv = jax.random.uniform(keys[7], (E,), jnp.float32, -scale, scale)
    bp = jax.random.uniform(keys[8], (E,), jnp.float32, -scale, scale)

    # Pack once (would happen at parameter-load time in a real model).
    packed = pack_mhsa_params(wq, bq, wk, bk, wv, bv, wp, bp,
                              n_heads=H, block_size=BLOCK_SIZE)
    packed = jax.tree_util.tree_map(
        lambda a: jax.block_until_ready(a) if isinstance(a, jax.Array) else a,
        packed)

    out = mh_self_attention(x, packed)
    out = jax.block_until_ready(out)

    ref = _reference(x, wq, bq, wk, bk, wv, bv, wp, bp, H)
    assert out.shape == (B, S, E)
    # bf16 matmul inputs (fp32 accumulation) -> loosened tolerance vs fp32 ref
    assert jnp.allclose(out, ref, atol=5e-2, rtol=5e-2), "mismatch vs reference"

    print("KERNEL_OK")
</pallas_src>

<mosaic_0001>
module attributes {stable_mosaic.version = 11 : i64} {
  func.func @_mhsa_kernel(%arg0: i32, %arg1: memref<1x8x32xbf16, #tpu.memory_space<vmem>>, %arg2: memref<32x96xbf16, #tpu.memory_space<vmem>>, %arg3: memref<1x96xf32, #tpu.memory_space<vmem>>, %arg4: memref<32x32xbf16, #tpu.memory_space<vmem>>, %arg5: memref<1x32xf32, #tpu.memory_space<vmem>>, %arg6: memref<8x8xf32, #tpu.memory_space<vmem>>, %arg7: memref<1x8x32xf32, #tpu.memory_space<vmem>>) attributes {dimension_semantics = [#tpu.dimension_semantics<parallel>], iteration_bounds = array<i64: 2>, scalar_prefetch = 0 : i64, scratch_operands = 0 : i64, tpu.core_type = #tpu.core_type<tc>, window_params = [{transform_indices = @transform_0, window_bounds = array<i64: 1, 8, 32>}, {pipeline_mode = #tpu.pipeline_mode<synchronous>, transform_indices = @transform_1, window_bounds = array<i64: 32, 96>}, {pipeline_mode = #tpu.pipeline_mode<synchronous>, transform_indices = @transform_2, window_bounds = array<i64: 1, 96>}, {pipeline_mode = #tpu.pipeline_mode<synchronous>, transform_indices = @transform_3, window_bounds = array<i64: 32, 32>}, {pipeline_mode = #tpu.pipeline_mode<synchronous>, transform_indices = @transform_4, window_bounds = array<i64: 1, 32>}, {pipeline_mode = #tpu.pipeline_mode<synchronous>, transform_indices = @transform_5, window_bounds = array<i64: 8, 8>}, {transform_indices = @transform_6, window_bounds = array<i64: 1, 8, 32>}]} {
    %c0 = arith.constant 0 : index
    %c0_0 = arith.constant 0 : index
    %c0_1 = arith.constant 0 : index
    %0 = vector.load %arg1[%c0, %c0_0, %c0_1] : memref<1x8x32xbf16, #tpu.memory_space<vmem>>, vector<1x8x32xbf16>
    %1 = vector.shape_cast %0 : vector<1x8x32xbf16> to vector<8x32xbf16>
    %c0_2 = arith.constant 0 : index
    %c0_3 = arith.constant 0 : index
    %2 = vector.load %arg2[%c0_2, %c0_3] : memref<32x96xbf16, #tpu.memory_space<vmem>>, vector<32x96xbf16>
    %cst = arith.constant dense<0.000000e+00> : vector<8x96xf32>
    %3 = tpu.matmul %1, %2, %cst {dimension_numbers = #tpu.dot_dimension_numbers<[1], [0], [0], [1], [0, 0, 1, 1], [], []>} : vector<8x32xbf16>, vector<32x96xbf16>, vector<8x96xf32> -> vector<8x96xf32>
    %c0_4 = arith.constant 0 : index
    %c0_5 = arith.constant 0 : index
    %4 = vector.load %arg3[%c0_4, %c0_5] : memref<1x96xf32, #tpu.memory_space<vmem>>, vector<1x96xf32>
    %5 = vector.broadcast %4 : vector<1x96xf32> to vector<8x96xf32>
    %6 = arith.addf %3, %5 : vector<8x96xf32>
    %7 = vector.extract_strided_slice %6 {offsets = [0, 0], sizes = [8, 32], strides = [1, 1]} : vector<8x96xf32> to vector<8x32xf32>
    %8 = arith.truncf %7 : vector<8x32xf32> to vector<8x32xbf16>
    %9 = vector.extract_strided_slice %6 {offsets = [0, 32], sizes = [8, 32], strides = [1, 1]} : vector<8x96xf32> to vector<8x32xf32>
    %10 = arith.truncf %9 : vector<8x32xf32> to vector<8x32xbf16>
    %11 = vector.extract_strided_slice %6 {offsets = [0, 64], sizes = [8, 32], strides = [1, 1]} : vector<8x96xf32> to vector<8x32xf32>
    %12 = arith.truncf %11 : vector<8x32xf32> to vector<8x32xbf16>
    %c0_6 = arith.constant 0 : index
    %c0_7 = arith.constant 0 : index
    %13 = vector.load %arg6[%c0_6, %c0_7] : memref<8x8xf32, #tpu.memory_space<vmem>>, vector<8x8xf32>
    %14 = vector.extract_strided_slice %8 {offsets = [0, 0], sizes = [8, 8], strides = [1, 1]} : vector<8x32xbf16> to vector<8x8xbf16>
    %15 = vector.extract_strided_slice %10 {offsets = [0, 0], sizes = [8, 8], strides = [1, 1]} : vector<8x32xbf16> to vector<8x8xbf16>
    %16 = vector.extract_strided_slice %12 {offsets = [0, 0], sizes = [8, 8], strides = [1, 1]} : vector<8x32xbf16> to vector<8x8xbf16>
    %cst_8 = arith.constant dense<0.000000e+00> : vector<8x8xf32>
    %17 = tpu.matmul %14, %15, %cst_8 {dimension_numbers = #tpu.dot_dimension_numbers<[1], [1], [0], [0], [0, 0, 1, 0], [], []>} : vector<8x8xbf16>, vector<8x8xbf16>, vector<8x8xf32> -> vector<8x8xf32>
    %18 = arith.addf %17, %13 : vector<8x8xf32>
    %cst_9 = arith.constant dense<0xFF800000> : vector<8xf32>
    %19 = vector.multi_reduction <maximumf>, %18, %cst_9 [1] : vector<8x8xf32> to vector<8xf32>
    %20 = vector.shape_cast %19 : vector<8xf32> to vector<8x1xf32>
    %21 = vector.broadcast %20 : vector<8x1xf32> to vector<8x8xf32>
    %22 = arith.subf %18, %21 : vector<8x8xf32>
    %23 = math.exp %22 : vector<8x8xf32>
    %cst_10 = arith.constant dense<0.000000e+00> : vector<8xf32>
    %24 = vector.multi_reduction <add>, %23, %cst_10 [1] : vector<8x8xf32> to vector<8xf32>
    %25 = vector.shape_cast %24 : vector<8xf32> to vector<8x1xf32>
    %26 = tpu.reciprocal %25 {approx = true} : vector<8x1xf32> -> vector<8x1xf32>
    %27 = vector.broadcast %26 : vector<8x1xf32> to vector<8x8xf32>
    %28 = arith.mulf %23, %27 : vector<8x8xf32>
    %29 = arith.truncf %28 : vector<8x8xf32> to vector<8x8xbf16>
    %cst_11 = arith.constant dense<0.000000e+00> : vector<8x8xf32>
    %30 = tpu.matmul %29, %16, %cst_11 {dimension_numbers = #tpu.dot_dimension_numbers<[1], [0], [0], [1], [0, 0, 1, 1], [], []>} : vector<8x8xbf16>, vector<8x8xbf16>, vector<8x8xf32> -> vector<8x8xf32>
    %31 = vector.extract_strided_slice %8 {offsets = [0, 8], sizes = [8, 8], strides = [1, 1]} : vector<8x32xbf16> to vector<8x8xbf16>
    %32 = vector.extract_strided_slice %10 {offsets = [0, 8], sizes = [8, 8], strides = [1, 1]} : vector<8x32xbf16> to vector<8x8xbf16>
    %33 = vector.extract_strided_slice %12 {offsets = [0, 8], sizes = [8, 8], strides = [1, 1]} : vector<8x32xbf16> to vector<8x8xbf16>
    %cst_12 = arith.constant dense<0.000000e+00> : vector<8x8xf32>
    %34 = tpu.matmul %31, %32, %cst_12 {dimension_numbers = #tpu.dot_dimension_numbers<[1], [1], [0], [0], [0, 0, 1, 0], [], []>} : vector<8x8xbf16>, vector<8x8xbf16>, vector<8x8xf32> -> vector<8x8xf32>
    %35 = arith.addf %34, %13 : vector<8x8xf32>
    %cst_13 = arith.constant dense<0xFF800000> : vector<8xf32>
    %36 = vector.multi_reduction <maximumf>, %35, %cst_13 [1] : vector<8x8xf32> to vector<8xf32>
    %37 = vector.shape_cast %36 : vector<8xf32> to vector<8x1xf32>
    %38 = vector.broadcast %37 : vector<8x1xf32> to vector<8x8xf32>
    %39 = arith.subf %35, %38 : vector<8x8xf32>
    %40 = math.exp %39 : vector<8x8xf32>
    %cst_14 = arith.constant dense<0.000000e+00> : vector<8xf32>
    %41 = vector.multi_reduction <add>, %40, %cst_14 [1] : vector<8x8xf32> to vector<8xf32>
    %42 = vector.shape_cast %41 : vector<8xf32> to vector<8x1xf32>
    %43 = tpu.reciprocal %42 {approx = true} : vector<8x1xf32> -> vector<8x1xf32>
    %44 = vector.broadcast %43 : vector<8x1xf32> to vector<8x8xf32>
    %45 = arith.mulf %40, %44 : vector<8x8xf32>
    %46 = arith.truncf %45 : vector<8x8xf32> to vector<8x8xbf16>
    %cst_15 = arith.constant dense<0.000000e+00> : vector<8x8xf32>
    %47 = tpu.matmul %46, %33, %cst_15 {dimension_numbers = #tpu.dot_dimension_numbers<[1], [0], [0], [1], [0, 0, 1, 1], [], []>} : vector<8x8xbf16>, vector<8x8xbf16>, vector<8x8xf32> -> vector<8x8xf32>
    %48 = vector.extract_strided_slice %8 {offsets = [0, 16], sizes = [8, 8], strides = [1, 1]} : vector<8x32xbf16> to vector<8x8xbf16>
    %49 = vector.extract_strided_slice %10 {offsets = [0, 16], sizes = [8, 8], strides = [1, 1]} : vector<8x32xbf16> to vector<8x8xbf16>
    %50 = vector.extract_strided_slice %12 {offsets = [0, 16], sizes = [8, 8], strides = [1, 1]} : vector<8x32xbf16> to vector<8x8xbf16>
    %cst_16 = arith.constant dense<0.000000e+00> : vector<8x8xf32>
    %51 = tpu.matmul %48, %49, %cst_16 {dimension_numbers = #tpu.dot_dimension_numbers<[1], [1], [0], [0], [0, 0, 1, 0], [], []>} : vector<8x8xbf16>, vector<8x8xbf16>, vector<8x8xf32> -> vector<8x8xf32>
    %52 = arith.addf %51, %13 : vector<8x8xf32>
    %cst_17 = arith.constant dense<0xFF800000> : vector<8xf32>
    %53 = vector.multi_reduction <maximumf>, %52, %cst_17 [1] : vector<8x8xf32> to vector<8xf32>
    %54 = vector.shape_cast %53 : vector<8xf32> to vector<8x1xf32>
    %55 = vector.broadcast %54 : vector<8x1xf32> to vector<8x8xf32>
    %56 = arith.subf %52, %55 : vector<8x8xf32>
    %57 = math.exp %56 : vector<8x8xf32>
    %cst_18 = arith.constant dense<0.000000e+00> : vector<8xf32>
    %58 = vector.multi_reduction <add>, %57, %cst_18 [1] : vector<8x8xf32> to vector<8xf32>
    %59 = vector.shape_cast %58 : vector<8xf32> to vector<8x1xf32>
    %60 = tpu.reciprocal %59 {approx = true} : vector<8x1xf32> -> vector<8x1xf32>
    %61 = vector.broadcast %60 : vector<8x1xf32> to vector<8x8xf32>
    %62 = arith.mulf %57, %61 : vector<8x8xf32>
    %63 = arith.truncf %62 : vector<8x8xf32> to vector<8x8xbf16>
    %cst_19 = arith.constant dense<0.000000e+00> : vector<8x8xf32>
    %64 = tpu.matmul %63, %50, %cst_19 {dimension_numbers = #tpu.dot_dimension_numbers<[1], [0], [0], [1], [0, 0, 1, 1], [], []>} : vector<8x8xbf16>, vector<8x8xbf16>, vector<8x8xf32> -> vector<8x8xf32>
    %65 = vector.extract_strided_slice %8 {offsets = [0, 24], sizes = [8, 8], strides = [1, 1]} : vector<8x32xbf16> to vector<8x8xbf16>
    %66 = vector.extract_strided_slice %10 {offsets = [0, 24], sizes = [8, 8], strides = [1, 1]} : vector<8x32xbf16> to vector<8x8xbf16>
    %67 = vector.extract_strided_slice %12 {offsets = [0, 24], sizes = [8, 8], strides = [1, 1]} : vector<8x32xbf16> to vector<8x8xbf16>
    %cst_20 = arith.constant dense<0.000000e+00> : vector<8x8xf32>
    %68 = tpu.matmul %65, %66, %cst_20 {dimension_numbers = #tpu.dot_dimension_numbers<[1], [1], [0], [0], [0, 0, 1, 0], [], []>} : vector<8x8xbf16>, vector<8x8xbf16>, vector<8x8xf32> -> vector<8x8xf32>
    %69 = arith.addf %68, %13 : vector<8x8xf32>
    %cst_21 = arith.constant dense<0xFF800000> : vector<8xf32>
    %70 = vector.multi_reduction <maximumf>, %69, %cst_21 [1] : vector<8x8xf32> to vector<8xf32>
    %71 = vector.shape_cast %70 : vector<8xf32> to vector<8x1xf32>
    %72 = vector.broadcast %71 : vector<8x1xf32> to vector<8x8xf32>
    %73 = arith.subf %69, %72 : vector<8x8xf32>
    %74 = math.exp %73 : vector<8x8xf32>
    %cst_22 = arith.constant dense<0.000000e+00> : vector<8xf32>
    %75 = vector.multi_reduction <add>, %74, %cst_22 [1] : vector<8x8xf32> to vector<8xf32>
    %76 = vector.shape_cast %75 : vector<8xf32> to vector<8x1xf32>
    %77 = tpu.reciprocal %76 {approx = true} : vector<8x1xf32> -> vector<8x1xf32>
    %78 = vector.broadcast %77 : vector<8x1xf32> to vector<8x8xf32>
    %79 = arith.mulf %74, %78 : vector<8x8xf32>
    %80 = arith.truncf %79 : vector<8x8xf32> to vector<8x8xbf16>
    %cst_23 = arith.constant dense<0.000000e+00> : vector<8x8xf32>
    %81 = tpu.matmul %80, %67, %cst_23 {dimension_numbers = #tpu.dot_dimension_numbers<[1], [0], [0], [1], [0, 0, 1, 1], [], []>} : vector<8x8xbf16>, vector<8x8xbf16>, vector<8x8xf32> -> vector<8x8xf32>
    %82 = tpu.concatenate %30, %47, %64, %81 in 1 : vector<8x8xf32>, vector<8x8xf32>, vector<8x8xf32>, vector<8x8xf32> -> vector<8x32xf32>
    %83 = arith.truncf %82 : vector<8x32xf32> to vector<8x32xbf16>
    %c0_24 = arith.constant 0 : index
    %c0_25 = arith.constant 0 : index
    %84 = vector.load %arg4[%c0_24, %c0_25] : memref<32x32xbf16, #tpu.memory_space<vmem>>, vector<32x32xbf16>
    %cst_26 = arith.constant dense<0.000000e+00> : vector<8x32xf32>
    %85 = tpu.matmul %83, %84, %cst_26 {dimension_numbers = #tpu.dot_dimension_numbers<[1], [0], [0], [1], [0, 0, 1, 1], [], []>} : vector<8x32xbf16>, vector<32x32xbf16>, vector<8x32xf32> -> vector<8x32xf32>
    %c0_27 = arith.constant 0 : index
    %c0_28 = arith.constant 0 : index
    %86 = vector.load %arg5[%c0_27, %c0_28] : memref<1x32xf32, #tpu.memory_space<vmem>>, vector<1x32xf32>
    %87 = vector.broadcast %86 : vector<1x32xf32> to vector<8x32xf32>
    %88 = arith.addf %85, %87 : vector<8x32xf32>
    %c0_29 = arith.constant 0 : index
    %c0_30 = arith.constant 0 : index
    %c0_31 = arith.constant 0 : index
    %89 = vector.load %arg7[%c0_29, %c0_30, %c0_31] : memref<1x8x32xf32, #tpu.memory_space<vmem>>, vector<1x8x32xf32>
    %90 = vector.shape_cast %89 : vector<1x8x32xf32> to vector<8x32xf32>
    %91 = vector.shape_cast %88 : vector<8x32xf32> to vector<1x8x32xf32>
    tpu.vector_store %arg7[%c0_29, %c0_30, %c0_31], %91 {strides = array<i32>} : memref<1x8x32xf32, #tpu.memory_space<vmem>>, vector<1x8x32xf32>,
    return
  }
  func.func @transform_0(%arg0: i32) -> (i32, i32, i32) {
    %c0_i32 = arith.constant 0 : i32
    %c0_i32_0 = arith.constant 0 : i32
    %c0_i32_1 = arith.constant 0 : i32
    return %arg0, %c0_i32, %c0_i32_0 : i32, i32, i32
  }
  func.func @transform_1(%arg0: i32) -> (i32, i32) {
    %c0_i32 = arith.constant 0 : i32
    %c0_i32_0 = arith.constant 0 : i32
    %c0_i32_1 = arith.constant 0 : i32
    return %c0_i32, %c0_i32_0 : i32, i32
  }
  func.func @transform_2(%arg0: i32) -> (i32, i32) {
    %c0_i32 = arith.constant 0 : i32
    %c0_i32_0 = arith.constant 0 : i32
    %c0_i32_1 = arith.constant 0 : i32
    return %c0_i32, %c0_i32_0 : i32, i32
  }
  func.func @transform_3(%arg0: i32) -> (i32, i32) {
    %c0_i32 = arith.constant 0 : i32
    %c0_i32_0 = arith.constant 0 : i32
    %c0_i32_1 = arith.constant 0 : i32
    return %c0_i32, %c0_i32_0 : i32, i32
  }
  func.func @transform_4(%arg0: i32) -> (i32, i32) {
    %c0_i32 = arith.constant 0 : i32
    %c0_i32_0 = arith.constant 0 : i32
    %c0_i32_1 = arith.constant 0 : i32
    return %c0_i32, %c0_i32_0 : i32, i32
  }
  func.func @transform_5(%arg0: i32) -> (i32, i32) {
    %c0_i32 = arith.constant 0 : i32
    %c0_i32_0 = arith.constant 0 : i32
    %c0_i32_1 = arith.constant 0 : i32
    return %c0_i32, %c0_i32_0 : i32, i32
  }
  func.func @transform_6(%arg0: i32) -> (i32, i32, i32) {
    %c0_i32 = arith.constant 0 : i32
    %c0_i32_0 = arith.constant 0 : i32
    %c0_i32_1 = arith.constant 0 : i32
    return %arg0, %c0_i32, %c0_i32_0 : i32, i32, i32
  }
}

</mosaic_0001>

<llo_original>
// kernel: tpu_custom_call.1
$region0: #{tpu_custom_call.1}
  #allocation0 [shape = 'u32[]', space=smem, size = 0x4, offset = 0x4, fixed_abs, tag = 'smem constant byte address 0x4 - core index']
  #allocation1 [shape = 'u32[144,128]{1,0:T(1,128)}', space=vmem, size = 0x12000, scoped, tag = 'internal scratch']
  %s0 = inlined_call_operand.hbm [shape: bf16[2,8,32], index: 0, kind: input, shape index: {}]
  %s1 = inlined_call_operand.hbm [shape: bf16[32,96], index: 1, kind: input, shape index: {}]
  %s2 = inlined_call_operand.vmem [shape: f32[1,96], index: 2, kind: input, shape index: {}]
  %s3 = inlined_call_operand.hbm [shape: bf16[32,32], index: 3, kind: input, shape index: {}]
  %s4 = inlined_call_operand.vmem [shape: f32[1,32], index: 4, kind: input, shape index: {}]
  %s5 = inlined_call_operand.vmem [shape: f32[8,8], index: 5, kind: input, shape index: {}]
  %s6 = inlined_call_operand.hbm [shape: f32[2,8,32], index: 6, kind: output, shape index: {}]
  %s7 = sld [smem:[#allocation0]]
  $region69: #{tpu_custom_call.1} parent=0
    _
  %s9 = ssub.s32 1, %s7
  %s10 = scalar_select 0, %s9, %s7
  $region1: #{tpu_custom_call.1} parent=0
    #allocation2 [shape = 'u8[4096]{0}', space=vmem, size = 0x1000, scoped, tag = 'input window, operand 0']
    #allocation3 [shape = 's32[2]{0}', space=sflag, size = 0x8, scoped, tag = 'scoped memory for tpu_custom_call.1']
    #allocation4 [shape = 's32[2]{0}', space=sflag, size = 0x8, scoped, tag = 'scoped memory for tpu_custom_call.1']
    #allocation5 [shape = 'u8[8192]{0}', space=vmem, size = 0x2000, scoped, tag = 'input window, operand 1, single buffered']
    #allocation6 [shape = 's32[1]{0}', space=sflag, size = 0x4, scoped, tag = 'scoped memory for tpu_custom_call.1']
    #allocation7 [shape = 'u8[8192]{0}', space=vmem, size = 0x2000, scoped, tag = 'input window, operand 3, single buffered']
    #allocation8 [shape = 'u8[8192]{0}', space=vmem, size = 0x2000, scoped, tag = 'output window, operand 0']
    %11 = vsyncpa [#allocation3], 0
    %s12 = scalar_lea.sflag [#allocation3], 1
    %13 = vsyncpa %s12, 0
    %14 = vsyncpa [#allocation6], 0
    %15 = vsyncpa [#allocation4], 0
    %s16 = scalar_lea.sflag [#allocation4], 1
    %17 = vsyncpa %s16, 0
    loop: start=0, step=1, limit=4
    $region2: #{tpu_custom_call.1} parent=1 // loop_pre_header
      _
    $region3: #{tpu_custom_call.1} parent=1 // loop_header
      %s19 = sphi 0, %s23
      %p20 = scmp.ge.s32.totalorder %s19, 4
      %s29 = sphi 0, %s31
      %s32 = sphi 0, %s29
      %s33 = sphi 0, %s32
      %s49 = sphi 0, %s33
      %s53 = sphi 0, %s53
      %s55 = sphi 0, %s53
      %s56 = sphi 0, %s55
      %s70 = sphi 0, %s56
      %s74 = sphi 0, %s74
      %s76 = sphi 0, %s74
      %s77 = sphi 0, %s76
      %s91 = sphi 0, %s77
      %s95 = sphi 0, %s95
      %s97 = sphi 0, %s95
      %s98 = sphi 0, %s97
      %s112 = sphi 0, %s98
      %s116 = sphi 0, %s116
      %s118 = sphi 0, %s116
      %s119 = sphi 0, %s118
      %s133 = sphi 0, %s119
      %s137 = sphi 0, %s137
      %s139 = sphi 0, %s137
      %s140 = sphi 0, %s139
      %s154 = sphi 0, %s140
      %s160 = sphi 0, %s162
      %s163 = sphi 0, %s160
      %s164 = sphi 0, %s163
      %s180 = sphi 0, %s164
    $region4: #{tpu_custom_call.1} parent=1 // loop_header_branch
      %22 = sbr.rel (%p20) target = $region8
    $region5: #{tpu_custom_call.1} parent=1 // loop_body
      %s24 = ssub.s32 %s19, 1
      %s25 = ssub.s32 %s19, 2
      %s26 = sadd.s32 %s19, 1
      %s27 = ssub.s32 %s19, %s26
      %p28 = scmp.eq.s32.totalorder %s27, 0
      %s30 = sadd.s32 %s29, 1
      %s31 = scalar_select %p28, %s29, %s30
      %p34 = pneg %p28
      %p35 = scmp.eq.s32.totalorder %s19, 1
      %p36 = por %p34, %p35
      %p37 = scmp.ne.s32.totalorder %s29, %s32
      %p38 = scmp.eq.s32.totalorder %s19, 0
      %p39 = por %p37, %p38
      %p40 = scmp.ne.s32.totalorder %s29, %s32
      %p41 = scmp.eq.s32.totalorder %s24, 1
      %p42 = por %p40, %p41
      %p43 = scmp.ne.s32.totalorder %s32, %s33
      %p44 = scmp.eq.s32.totalorder %s24, 0
      %p45 = por %p43, %p44
      %p46 = scmp.ne.s32.totalorder %s32, %s33
      %p47 = scmp.eq.s32.totalorder %s25, 1
      %p48 = por %p46, %p47
      %p50 = scmp.ne.s32.totalorder %s33, %s49
      %p51 = scmp.eq.s32.totalorder %s25, 0
      %p52 = por %p50, %p51
      %s54 = sadd.s32 %s53, 1
      %p57 = scmp.eq.s32.totalorder %s19, 1
      %p58 = scmp.ne.s32.totalorder %s53, %s55
      %p59 = scmp.eq.s32.totalorder %s19, 0
      %p60 = por %p58, %p59
      %p61 = scmp.ne.s32.totalorder %s53, %s55
      %p62 = scmp.eq.s32.totalorder %s24, 1
      %p63 = por %p61, %p62
      %p64 = scmp.ne.s32.totalorder %s55, %s56
      %p65 = scmp.eq.s32.totalorder %s24, 0
      %p66 = por %p64, %p65
      %p67 = scmp.ne.s32.totalorder %s55, %s56
      %p68 = scmp.eq.s32.totalorder %s25, 1
      %p69 = por %p67, %p68
      %p71 = scmp.ne.s32.totalorder %s56, %s70
      %p72 = scmp.eq.s32.totalorder %s25, 0
      %p73 = por %p71, %p72
      %s75 = sadd.s32 %s74, 1
      %p78 = scmp.eq.s32.totalorder %s19, 1
      %p79 = scmp.ne.s32.totalorder %s74, %s76
      %p80 = scmp.eq.s32.totalorder %s19, 0
      %p81 = por %p79, %p80
      %p82 = scmp.ne.s32.totalorder %s74, %s76
      %p83 = scmp.eq.s32.totalorder %s24, 1
      %p84 = por %p82, %p83
      %p85 = scmp.ne.s32.totalorder %s76, %s77
      %p86 = scmp.eq.s32.totalorder %s24, 0
      %p87 = por %p85, %p86
      %p88 = scmp.ne.s32.totalorder %s76, %s77
      %p89 = scmp.eq.s32.totalorder %s25, 1
      %p90 = por %p88, %p89
      %p92 = scmp.ne.s32.totalorder %s77, %s91
      %p93 = scmp.eq.s32.totalorder %s25, 0
      %p94 = por %p92, %p93
      %s96 = sadd.s32 %s95, 1
      %p99 = scmp.eq.s32.totalorder %s19, 1
      %p100 = scmp.ne.s32.totalorder %s95, %s97
      %p101 = scmp.eq.s32.totalorder %s19, 0
      %p102 = por %p100, %p101
      %p103 = scmp.ne.s32.totalorder %s95, %s97
      %p104 = scmp.eq.s32.totalorder %s24, 1
      %p105 = por %p103, %p104
      %p106 = scmp.ne.s32.totalorder %s97, %s98
      %p107 = scmp.eq.s32.totalorder %s24, 0
      %p108 = por %p106, %p107
      %p109 = scmp.ne.s32.totalorder %s97, %s98
      %p110 = scmp.eq.s32.totalorder %s25, 1
      %p111 = por %p109, %p110
      %p113 = scmp.ne.s32.totalorder %s98, %s112
      %p114 = scmp.eq.s32.totalorder %s25, 0
      %p115 = por %p113, %p114
      %s117 = sadd.s32 %s116, 1
      %p120 = scmp.eq.s32.totalorder %s19, 1
      %p121 = scmp.ne.s32.totalorder %s116, %s118
      %p122 = scmp.eq.s32.totalorder %s19, 0
      %p123 = por %p121, %p122
      %p124 = scmp.ne.s32.totalorder %s116, %s118
      %p125 = scmp.eq.s32.totalorder %s24, 1
      %p126 = por %p124, %p125
      %p127 = scmp.ne.s32.totalorder %s118, %s119
      %p128 = scmp.eq.s32.totalorder %s24, 0
      %p129 = por %p127, %p128
      %p130 = scmp.ne.s32.totalorder %s118, %s119
      %p131 = scmp.eq.s32.totalorder %s25, 1
      %p132 = por %p130, %p131
      %p134 = scmp.ne.s32.totalorder %s119, %s133
      %p135 = scmp.eq.s32.totalorder %s25, 0
      %p136 = por %p134, %p135
      %s138 = sadd.s32 %s137, 1
      %p141 = scmp.eq.s32.totalorder %s19, 1
      %p142 = scmp.ne.s32.totalorder %s137, %s139
      %p143 = scmp.eq.s32.totalorder %s19, 0
      %p144 = por %p142, %p143
      %p145 = scmp.ne.s32.totalorder %s137, %s139
      %p146 = scmp.eq.s32.totalorder %s24, 1
      %p147 = por %p145, %p146
      %p148 = scmp.ne.s32.totalorder %s139, %s140
      %p149 = scmp.eq.s32.totalorder %s24, 0
      %p150 = por %p148, %p149
      %p151 = scmp.ne.s32.totalorder %s139, %s140
      %p152 = scmp.eq.s32.totalorder %s25, 1
      %p153 = por %p151, %p152
      %p155 = scmp.ne.s32.totalorder %s140, %s154
      %p156 = scmp.eq.s32.totalorder %s25, 0
      %p157 = por %p155, %p156
      %s158 = ssub.s32 %s19, %s26
      %p159 = scmp.eq.s32.totalorder %s158, 0
      %s161 = sadd.s32 %s160, 1
      %s162 = scalar_select %p159, %s160, %s161
      %p165 = pneg %p159
      %p166 = scmp.eq.s32.totalorder %s19, 1
      %p167 = por %p165, %p166
      %p168 = scmp.ne.s32.totalorder %s160, %s163
      %p169 = scmp.eq.s32.totalorder %s19, 0
      %p170 = por %p168, %p169
      %p171 = scmp.ne.s32.totalorder %s160, %s163
      %p172 = scmp.eq.s32.totalorder %s24, 1
      %p173 = por %p171, %p172
      %p174 = scmp.ne.s32.totalorder %s163, %s164
      %p175 = scmp.eq.s32.totalorder %s24, 0
      %p176 = por %p174, %p175
      %p177 = scmp.ne.s32.totalorder %s163, %s164
      %p178 = scmp.eq.s32.totalorder %s25, 1
      %p179 = por %p177, %p178
      %p181 = scmp.ne.s32.totalorder %s164, %s180
      %p182 = scmp.eq.s32.totalorder %s25, 0
      %p183 = por %p181, %p182
      %p184 = scmp.le.s32.totalorder 1, %s19
      %p185 = scmp.lt.s32.totalorder %s19, 3
      %p186 = pnand %p184, %p185
      %p187 = pneg %p186
      // Predicated region
      $region9: #{tpu_custom_call.1} parent=5 // pred_check
        _
      $region10: #{tpu_custom_call.1} parent=5 // pred_check_branch
        %189 = sbr.rel (%p186) target = $region12
      $region11: #{tpu_custom_call.1} parent=5 // pred_region
        %s190 = ssub.s32 %s19, 1
        // Predicated region
        $region13: #{tpu_custom_call.1} parent=11 // pred_check
          %p191 = pneg %p66
        $region14: #{tpu_custom_call.1} parent=11 // pred_check_branch
          %193 = sbr.rel (%p191) target = $region16
        $region15: #{tpu_custom_call.1} parent=11 // pred_region
          %s195 = ssub.s32 256, 256
          %196 = vsyncadd [#allocation6], %s195
          %s197 = sshll.u32 [#allocation5], 4
          %s198 = int_to_ptr.vmem [resolvable:$true] %s197
          %203 = dma.hbm_to_vmem [thread:$0]  %s1, 256, %s198, [#allocation6], 64, 64, 4
        $region16: #{tpu_custom_call.1} parent=11 // pred_fallthru
          _
        // Predicated region
        $region17: #{tpu_custom_call.1} parent=11 // pred_check
          %p204 = pneg %p87
        $region18: #{tpu_custom_call.1} parent=11 // pred_check_branch
          %206 = sbr.rel (%p204) target = $region20
        $region19: #{tpu_custom_call.1} parent=11 // pred_region
          _
        $region20: #{tpu_custom_call.1} parent=11 // pred_fallthru
          _
        // Predicated region
        $region21: #{tpu_custom_call.1} parent=11 // pred_check
          %p207 = pneg %p108
        $region22: #{tpu_custom_call.1} parent=11 // pred_check_branch
          %209 = sbr.rel (%p207) target = $region24
        $region23: #{tpu_custom_call.1} parent=11 // pred_region
          %s211 = ssub.s32 256, 256
          %212 = vsyncadd [#allocation6], %s211
          %s213 = sshll.u32 [#allocation7], 4
          %s214 = int_to_ptr.vmem [resolvable:$true] %s213
          %219 = dma.hbm_to_vmem [thread:$0]  %s3, 256, %s214, [#allocation6], 64, 64, 4
        $region24: #{tpu_custom_call.1} parent=11 // pred_fallthru
          _
        // Predicated region
        $region25: #{tpu_custom_call.1} parent=11 // pred_check
          %p220 = pneg %p129
        $region26: #{tpu_custom_call.1} parent=11 // pred_check_branch
          %222 = sbr.rel (%p220) target = $region28
        $region27: #{tpu_custom_call.1} parent=11 // pred_region
          _
        $region28: #{tpu_custom_call.1} parent=11 // pred_fallthru
          _
        // Predicated region
        $region29: #{tpu_custom_call.1} parent=11 // pred_check
          %p223 = pneg %p150
        $region30: #{tpu_custom_call.1} parent=11 // pred_check_branch
          %225 = sbr.rel (%p223) target = $region32
        $region31: #{tpu_custom_call.1} parent=11 // pred_region
          _
        $region32: #{tpu_custom_call.1} parent=11 // pred_fallthru
          _
      $region12: #{tpu_custom_call.1} parent=5 // pred_fallthru
        _
      %p226 = scmp.lt.s32.totalorder %s19, 2
      // Predicated region
      $region33: #{tpu_custom_call.1} parent=5 // pred_check
        %p227 = pneg %p226
      $region34: #{tpu_custom_call.1} parent=5 // pred_check_branch
        %229 = sbr.rel (%p227) target = $region36
      $region35: #{tpu_custom_call.1} parent=5 // pred_region
        // Predicated region
        $region37: #{tpu_custom_call.1} parent=35 // pred_check
          %p230 = pneg %p39
        $region38: #{tpu_custom_call.1} parent=35 // pred_check_branch
          %232 = sbr.rel (%p230) target = $region40
        $region39: #{tpu_custom_call.1} parent=35 // pred_region
          %s233 = sand.u32 %s29, 1
          %s234 = scalar_lea.sflag [#allocation3], %s233
          %s235 = sand.u32 %s29, 1
          %s236 = smul.addr %s235, 4
          %s237 = scalar_lea.vmem [#allocation2], %s236
          %s239 = ssub.s32 64, 64
          %240 = vsyncadd %s234, %s239
          %s241 = smul.addr %s19, 64
          %s242 = scalar_lea.hbm %s0, %s241
          %s244 = sshll.u32 %s237, 4
          %s245 = int_to_ptr.vmem [resolvable:$true] %s244
          %247 = dma.hbm_to_vmem [thread:$0]  %s242, 64, %s245, %s234
        $region40: #{tpu_custom_call.1} parent=35 // pred_fallthru
          _
      $region36: #{tpu_custom_call.1} parent=5 // pred_fallthru
        _
      %p248 = scmp.le.s32.totalorder 1, %s19
      %p249 = scmp.lt.s32.totalorder %s19, 3
      %p250 = pnand %p248, %p249
      %p251 = pneg %p250
      // Predicated region
      $region41: #{tpu_custom_call.1} parent=5 // pred_check
        _
      $region42: #{tpu_custom_call.1} parent=5 // pred_check_branch
        %253 = sbr.rel (%p250) target = $region44
      $region43: #{tpu_custom_call.1} parent=5 // pred_region
        %s254 = ssub.s32 %s19, 1
        %s255 = sand.u32 %s32, 1
        %s256 = scalar_lea.sflag [#allocation3], %s255
        %s257 = sand.u32 %s32, 1
        %s258 = smul.addr %s257, 4
        %s259 = scalar_lea.vmem [#allocation2], %s258
        // Predicated region
        $region45: #{tpu_custom_call.1} parent=43 // pred_check
          %p260 = pneg %p45
        $region46: #{tpu_custom_call.1} parent=43 // pred_check_branch
          %262 = sbr.rel (%p260) target = $region48
        $region47: #{tpu_custom_call.1} parent=43 // pred_region
          %263 = dma.done %s256, 64
        $region48: #{tpu_custom_call.1} parent=43 // pred_fallthru
          _
        // Predicated region
        $region49: #{tpu_custom_call.1} parent=43 // pred_check
          %p264 = pneg %p66
        $region50: #{tpu_custom_call.1} parent=43 // pred_check_branch
          %266 = sbr.rel (%p264) target = $region52
        $region51: #{tpu_custom_call.1} parent=43 // pred_region
          %267 = dma.done [#allocation6], 256
        $region52: #{tpu_custom_call.1} parent=43 // pred_fallthru
          _
        // Predicated region
        $region53: #{tpu_custom_call.1} parent=43 // pred_check
          %p268 = pneg %p108
        $region54: #{tpu_custom_call.1} parent=43 // pred_check_branch
          %270 = sbr.rel (%p268) target = $region56
        $region55: #{tpu_custom_call.1} parent=43 // pred_region
          %271 = dma.done [#allocation6], 256
        $region56: #{tpu_custom_call.1} parent=43 // pred_fallthru
          _
        %s272 = sand.u32 %s32, 1
        %s273 = scalar_lea.sflag [#allocation3], %s272
        %s274 = sand.u32 %s32, 1
        %s275 = smul.addr %s274, 4
        %s276 = scalar_lea.vmem [#allocation2], %s275
        %p277 = pneg %p45
        %p278 = pneg %p42
        %p279 = pneg %p66
        %p280 = pneg %p63
        %p281 = pneg %p87
        %p282 = pneg %p84
        %p283 = pneg %p108
        %p284 = pneg %p105
        %p285 = pneg %p129
        %p286 = pneg %p126
        %p287 = pneg %p150
        %p288 = pneg %p147
        %p289 = pneg %p176
        %p290 = pneg %p173
        %s291 = sand.u32 %s163, 1
        %s292 = scalar_lea.sflag [#allocation4], %s291
        %s293 = sand.u32 %s163, 1
        %s294 = smul.addr %s293, 8
        %s295 = scalar_lea.vmem [#allocation8], %s294
        %v297 = vld [vmem:[%s259] sm:$0xf]
        %v298 = vld [vmem:[#allocation5] sm:$0xf]
        %v299 = vld [vmem:[#allocation5 + $0x4] sm:$0xf]
        %v300 = vld [vmem:[#allocation5 + $0x8] sm:$0xf]
        %v301 = vld [vmem:[#allocation5 + $0xc] sm:$0xf]
        %v302 = vld [vmem:[%s2] sm:$0x1]
        %v304 = vlaneseq
        %v305 = vshrl.u32 %v304, 7
        %v306 = vsub.s32 0, %v305
        %v307 = vrot.slane %v302, %v306
        %v313 = vunpack.c.l.b16 %v298
        %v314 = vunpack.c.l.b16 %v299
        %v315 = vunpack.c.l.b16 %v300
        %v316 = vunpack.c.l.b16 %v301
        %v317 = vpack.c.b16 %v314, %v313
        %v318 = vpack.c.b16 %v316, %v315
        %vm321 = vcmask 261120
        %v323 = vsel %vm321, %v297, 0
        %325 = vmatprep.subr.bf16.mxu0 0
        %326 = vmatpush1.bf16.msra.mxu0 %v317
        %327 = vmatprep.subr.bf16.mxu0 0
        %328 = vmatpush1.bf16.msra.mxu0 %v318
        %329 = vmatprep.subr.bf16.mxu0 0
        %330 = vmatpush1.bf16.msra.mxu0 0
        %331 = vmatprep.subr.bf16.mxu0 0
        %332 = vmatpush1.bf16.msra.mxu0 0
        %333 = vmatprep.subr.bf16.mxu0 0
        %334 = vmatpush1.bf16.msra.mxu0 0
        %335 = vmatprep.subr.bf16.mxu0 0
        %336 = vmatpush1.bf16.msra.mxu0 0
        %337 = vmatprep.subr.bf16.mxu0 0
        %338 = vmatpush1.bf16.msra.mxu0 0
        %339 = vmatprep.subr.bf16.mxu0 0
        %340 = vmatpush1.bf16.msra.mxu0 0
        %341 = vmatprep.subr.bf16.mxu0 0
        %342 = vmatpush1.bf16.msra.mxu0 0
        %343 = vmatprep.subr.bf16.mxu0 0
        %344 = vmatpush1.bf16.msra.mxu0 0
        %345 = vmatprep.subr.bf16.mxu0 0
        %346 = vmatpush1.bf16.msra.mxu0 0
        %347 = vmatprep.subr.bf16.mxu0 0
        %348 = vmatpush1.bf16.msra.mxu0 0
        %349 = vmatprep.subr.bf16.mxu0 0
        %350 = vmatpush1.bf16.msra.mxu0 0
        %351 = vmatprep.subr.bf16.mxu0 0
        %352 = vmatpush1.bf16.msra.mxu0 0
        %353 = vmatprep.subr.bf16.mxu0 0
        %354 = vmatpush1.bf16.msra.mxu0 0
        %355 = vmatprep.subr.bf16.mxu0 0
        %356 = vmatpush1.bf16.msra.mxu0 0
        %357 = vmatprep.mubr.bf16.mxu0 0
        %358 = vmatmul.mubr.bf16.gmra.mrb[0].mxu0 %v323
        %v359 = vpop.f32.mrb[0].mxu0
        %v360 = vadd.f32 %v307, %v359
        %v361 = vpop.f32.mrb[0].mxu0
        %v362 = vpop.f32.mrb[0].mxu0
        %v363 = vpop.f32.mrb[0].mxu0
        %364 = vdwg.mxu0
        %v365 = vpack.c.bf16 %v360, %v360
        %v366 = vld [vmem:[%s5] sm:$0xff]
        %368 = vrot.lane.b32.xlu0 %v365, 96
        %v369 = vpop.permute.xlu0 %368
        %vm370 = vcmask 64512
        %v372 = vsel %vm370, %v365, 0
        %v375 = vsel %vm370, %v369, 0
        %377 = vmatprep.subr.bf16.mxu0 0
        %378 = vmatpush1.bf16.xpose.msra.mxu0 %v375
        %379 = vmatprep.subr.bf16.mxu0 0
        %380 = vmatpush1.bf16.xpose.msra.mxu0 0
        %381 = vmatprep.subr.bf16.mxu0 0
        %382 = vmatpush1.bf16.xpose.msra.mxu0 0
        %383 = vmatprep.subr.bf16.mxu0 0
        %384 = vmatpush1.bf16.xpose.msra.mxu0 0
        %385 = vmatprep.subr.bf16.mxu0 0
        %386 = vmatpush1.bf16.xpose.msra.mxu0 0
        %387 = vmatprep.subr.bf16.mxu0 0
        %388 = vmatpush1.bf16.xpose.msra.mxu0 0
        %389 = vmatprep.subr.bf16.mxu0 0
        %390 = vmatpush1.bf16.xpose.msra.mxu0 0
        %391 = vmatprep.subr.bf16.mxu0 0
        %392 = vmatpush1.bf16.xpose.msra.mxu0 0
        %393 = vmatprep.subr.bf16.mxu0 0
        %394 = vmatpush1.bf16.xpose.msra.mxu0 0
        %395 = vmatprep.subr.bf16.mxu0 0
        %396 = vmatpush1.bf16.xpose.msra.mxu0 0
        %397 = vmatprep.subr.bf16.mxu0 0
        %398 = vmatpush1.bf16.xpose.msra.mxu0 0
        %399 = vmatprep.subr.bf16.mxu0 0
        %400 = vmatpush1.bf16.xpose.msra.mxu0 0
        %401 = vmatprep.subr.bf16.mxu0 0
        %402 = vmatpush1.bf16.xpose.msra.mxu0 0
        %403 = vmatprep.subr.bf16.mxu0 0
        %404 = vmatpush1.bf16.xpose.msra.mxu0 0
        %405 = vmatprep.subr.bf16.mxu0 0
        %406 = vmatpush1.bf16.xpose.msra.mxu0 0
        %407 = vmatprep.subr.bf16.mxu0 0
        %408 = vmatpush1.bf16.xpose.msra.mxu0 0
        %409 = vmatprep.mubr.bf16.mxu0 0
        %410 = vmatmul.mubr.bf16.gmra.mrb[0].mxu0 %v372
        %v411 = vpop.f32.mrb[0].mxu0
        %v412 = vadd.f32 %v366, %v411
        %v413 = vpop.f32.mrb[0].mxu0
        %v414 = vpop.f32.mrb[0].mxu0
        %v415 = vpop.f32.mrb[0].mxu0
        %416 = vdwg.mxu0
        %v417 = vsel %vm370, %v412, -inf
        %418 = vmax.xlane.f32.xlu0 %v417
        %v419 = vpop.xlane.xlu0 %418
        %v420 = vsub.f32 %v412, %v419
        %v421 = vmul.f32 %v420, 1.442695
        %v422 = vpow.pop %v421
        %v423 = vsel %vm370, %v422, 0.0
        %424 = vadd.xlane.f32.xlu0 %v423
        %v425 = vpop.xlane.xlu0 %424
        %v426 = vrcp.pop %v425
        %v427 = vmul.f32 %v422, %v426
        %v428 = vpack.c.bf16 %v427, %v427
        %429 = vrot.lane.b32.xlu0 %v365, 64
        %v430 = vpop.permute.xlu0 %429
        %v432 = vsel %vm370, %v428, 0
        %vm434 = vcmask 1043456
        %v436 = vsel %vm434, %v430, 0
        %438 = vmatprep.subr.bf16.mxu0 0
        %439 = vmatpush1.bf16.msra.mxu0 %v436
        %440 = vmatprep.subr.bf16.mxu0 0
        %441 = vmatpush1.bf16.msra.mxu0 0
        %442 = vmatprep.subr.bf16.mxu0 0
        %443 = vmatpush1.bf16.msra.mxu0 0
        %444 = vmatprep.subr.bf16.mxu0 0
        %445 = vmatpush1.bf16.msra.mxu0 0
        %446 = vmatprep.subr.bf16.mxu0 0
        %447 = vmatpush1.bf16.msra.mxu0 0
        %448 = vmatprep.subr.bf16.mxu0 0
        %449 = vmatpush1.bf16.msra.mxu0 0
        %450 = vmatprep.subr.bf16.mxu0 0
        %451 = vmatpush1.bf16.msra.mxu0 0
        %452 = vmatprep.subr.bf16.mxu0 0
        %453 = vmatpush1.bf16.msra.mxu0 0
        %454 = vmatprep.subr.bf16.mxu0 0
        %455 = vmatpush1.bf16.msra.mxu0 0
        %456 = vmatprep.subr.bf16.mxu0 0
        %457 = vmatpush1.bf16.msra.mxu0 0
        %458 = vmatprep.subr.bf16.mxu0 0
        %459 = vmatpush1.bf16.msra.mxu0 0
        %460 = vmatprep.subr.bf16.mxu0 0
        %461 = vmatpush1.bf16.msra.mxu0 0
        %462 = vmatprep.subr.bf16.mxu0 0
        %463 = vmatpush1.bf16.msra.mxu0 0
        %464 = vmatprep.subr.bf16.mxu0 0
        %465 = vmatpush1.bf16.msra.mxu0 0
        %466 = vmatprep.subr.bf16.mxu0 0
        %467 = vmatpush1.bf16.msra.mxu0 0
        %468 = vmatprep.subr.bf16.mxu0 0
        %469 = vmatpush1.bf16.msra.mxu0 0
        %470 = vmatprep.mubr.bf16.mxu0 0
        %471 = vmatmul.mubr.bf16.gmra.mrb[0].mxu0 %v432
        %v472 = vpop.f32.mrb[0].mxu0
        %v473 = vadd.f32 0.0, %v472
        %v474 = vpop.f32.mrb[0].mxu0
        %v475 = vpop.f32.mrb[0].mxu0
        %v476 = vpop.f32.mrb[0].mxu0
        %477 = vdwg.mxu0
        %478 = vrot.lane.b32.xlu0 %v365, 120
        %v479 = vpop.permute.xlu0 %478
        %480 = vrot.lane.b32.xlu0 %v365, 88
        %v481 = vpop.permute.xlu0 %480
        %v483 = vsel %vm370, %v479, 0
        %v486 = vsel %vm370, %v481, 0
        %488 = vmatprep.subr.bf16.mxu0 0
        %489 = vmatpush1.bf16.xpose.msra.mxu0 %v486
        %490 = vmatprep.subr.bf16.mxu0 0
        %491 = vmatpush1.bf16.xpose.msra.mxu0 0
        %492 = vmatprep.subr.bf16.mxu0 0
        %493 = vmatpush1.bf16.xpose.msra.mxu0 0
        %494 = vmatprep.subr.bf16.mxu0 0
        %495 = vmatpush1.bf16.xpose.msra.mxu0 0
        %496 = vmatprep.subr.bf16.mxu0 0
        %497 = vmatpush1.bf16.xpose.msra.mxu0 0
        %498 = vmatprep.subr.bf16.mxu0 0
        %499 = vmatpush1.bf16.xpose.msra.mxu0 0
        %500 = vmatprep.subr.bf16.mxu0 0
        %501 = vmatpush1.bf16.xpose.msra.mxu0 0
        %502 = vmatprep.subr.bf16.mxu0 0
        %503 = vmatpush1.bf16.xpose.msra.mxu0 0
        %504 = vmatprep.subr.bf16.mxu0 0
        %505 = vmatpush1.bf16.xpose.msra.mxu0 0
        %506 = vmatprep.subr.bf16.mxu0 0
        %507 = vmatpush1.bf16.xpose.msra.mxu0 0
        %508 = vmatprep.subr.bf16.mxu0 0
        %509 = vmatpush1.bf16.xpose.msra.mxu0 0
        %510 = vmatprep.subr.bf16.mxu0 0
        %511 = vmatpush1.bf16.xpose.msra.mxu0 0
        %512 = vmatprep.subr.bf16.mxu0 0
        %513 = vmatpush1.bf16.xpose.msra.mxu0 0
        %514 = vmatprep.subr.bf16.mxu0 0
        %515 = vmatpush1.bf16.xpose.msra.mxu0 0
        %516 = vmatprep.subr.bf16.mxu0 0
        %517 = vmatpush1.bf16.xpose.msra.mxu0 0
        %518 = vmatprep.subr.bf16.mxu0 0
        %519 = vmatpush1.bf16.xpose.msra.mxu0 0
        %520 = vmatprep.mubr.bf16.mxu0 0
        %521 = vmatmul.mubr.bf16.gmra.mrb[0].mxu0 %v483
        %v522 = vpop.f32.mrb[0].mxu0
        %v523 = vadd.f32 %v366, %v522
        %v524 = vpop.f32.mrb[0].mxu0
        %v525 = vpop.f32.mrb[0].mxu0
        %v526 = vpop.f32.mrb[0].mxu0
        %527 = vdwg.mxu0
        %v528 = vsel %vm370, %v523, -inf
        %529 = vmax.xlane.f32.xlu0 %v528
        %v530 = vpop.xlane.xlu0 %529
        %v531 = vsub.f32 %v523, %v530
        %v532 = vmul.f32 %v531, 1.442695
        %v533 = vpow.pop %v532
        %v534 = vsel %vm370, %v533, 0.0
        %535 = vadd.xlane.f32.xlu0 %v534
        %v536 = vpop.xlane.xlu0 %535
        %v537 = vrcp.pop %v536
        %v538 = vmul.f32 %v533, %v537
        %v539 = vpack.c.bf16 %v538, %v538
        %540 = vrot.lane.b32.xlu0 %v365, 56
        %v541 = vpop.permute.xlu0 %540
        %v543 = vsel %vm370, %v539, 0
        %v546 = vsel %vm434, %v541, 0
        %548 = vmatprep.subr.bf16.mxu0 0
        %549 = vmatpush1.bf16.msra.mxu0 %v546
        %550 = vmatprep.subr.bf16.mxu0 0
        %551 = vmatpush1.bf16.msra.mxu0 0
        %552 = vmatprep.subr.bf16.mxu0 0
        %553 = vmatpush1.bf16.msra.mxu0 0
        %554 = vmatprep.subr.bf16.mxu0 0
        %555 = vmatpush1.bf16.msra.mxu0 0
        %556 = vmatprep.subr.bf16.mxu0 0
        %557 = vmatpush1.bf16.msra.mxu0 0
        %558 = vmatprep.subr.bf16.mxu0 0
        %559 = vmatpush1.bf16.msra.mxu0 0
        %560 = vmatprep.subr.bf16.mxu0 0
        %561 = vmatpush1.bf16.msra.mxu0 0
        %562 = vmatprep.subr.bf16.mxu0 0
        %563 = vmatpush1.bf16.msra.mxu0 0
        %564 = vmatprep.subr.bf16.mxu0 0
        %565 = vmatpush1.bf16.msra.mxu0 0
        %566 = vmatprep.subr.bf16.mxu0 0
        %567 = vmatpush1.bf16.msra.mxu0 0
        %568 = vmatprep.subr.bf16.mxu0 0
        %569 = vmatpush1.bf16.msra.mxu0 0
        %570 = vmatprep.subr.bf16.mxu0 0
        %571 = vmatpush1.bf16.msra.mxu0 0
        %572 = vmatprep.subr.bf16.mxu0 0
        %573 = vmatpush1.bf16.msra.mxu0 0
        %574 = vmatprep.subr.bf16.mxu0 0
        %575 = vmatpush1.bf16.msra.mxu0 0
        %576 = vmatprep.subr.bf16.mxu0 0
        %577 = vmatpush1.bf16.msra.mxu0 0
        %578 = vmatprep.subr.bf16.mxu0 0
        %579 = vmatpush1.bf16.msra.mxu0 0
        %580 = vmatprep.mubr.bf16.mxu0 0
        %581 = vmatmul.mubr.bf16.gmra.mrb[0].mxu0 %v543
        %v582 = vpop.f32.mrb[0].mxu0
        %v583 = vadd.f32 0.0, %v582
        %v584 = vpop.f32.mrb[0].mxu0
        %v585 = vpop.f32.mrb[0].mxu0
        %v586 = vpop.f32.mrb[0].mxu0
        %587 = vdwg.mxu0
        %588 = vrot.lane.b32.xlu0 %v365, 112
        %v589 = vpop.permute.xlu0 %588
        %590 = vrot.lane.b32.xlu0 %v365, 80
        %v591 = vpop.permute.xlu0 %590
        %v593 = vsel %vm370, %v589, 0
        %v596 = vsel %vm370, %v591, 0
        %598 = vmatprep.subr.bf16.mxu0 0
        %599 = vmatpush1.bf16.xpose.msra.mxu0 %v596
        %600 = vmatprep.subr.bf16.mxu0 0
        %601 = vmatpush1.bf16.xpose.msra.mxu0 0
        %602 = vmatprep.subr.bf16.mxu0 0
        %603 = vmatpush1.bf16.xpose.msra.mxu0 0
        %604 = vmatprep.subr.bf16.mxu0 0
        %605 = vmatpush1.bf16.xpose.msra.mxu0 0
        %606 = vmatprep.subr.bf16.mxu0 0
        %607 = vmatpush1.bf16.xpose.msra.mxu0 0
        %608 = vmatprep.subr.bf16.mxu0 0
        %609 = vmatpush1.bf16.xpose.msra.mxu0 0
        %610 = vmatprep.subr.bf16.mxu0 0
        %611 = vmatpush1.bf16.xpose.msra.mxu0 0
        %612 = vmatprep.subr.bf16.mxu0 0
        %613 = vmatpush1.bf16.xpose.msra.mxu0 0
        %614 = vmatprep.subr.bf16.mxu0 0
        %615 = vmatpush1.bf16.xpose.msra.mxu0 0
        %616 = vmatprep.subr.bf16.mxu0 0
        %617 = vmatpush1.bf16.xpose.msra.mxu0 0
        %618 = vmatprep.subr.bf16.mxu0 0
        %619 = vmatpush1.bf16.xpose.msra.mxu0 0
        %620 = vmatprep.subr.bf16.mxu0 0
        %621 = vmatpush1.bf16.xpose.msra.mxu0 0
        %622 = vmatprep.subr.bf16.mxu0 0
        %623 = vmatpush1.bf16.xpose.msra.mxu0 0
        %624 = vmatprep.subr.bf16.mxu0 0
        %625 = vmatpush1.bf16.xpose.msra.mxu0 0
        %626 = vmatprep.subr.bf16.mxu0 0
        %627 = vmatpush1.bf16.xpose.msra.mxu0 0
        %628 = vmatprep.subr.bf16.mxu0 0
        %629 = vmatpush1.bf16.xpose.msra.mxu0 0
        %630 = vmatprep.mubr.bf16.mxu0 0
        %631 = vmatmul.mubr.bf16.gmra.mrb[0].mxu0 %v593
        %v632 = vpop.f32.mrb[0].mxu0
        %v633 = vadd.f32 %v366, %v632
        %v634 = vpop.f32.mrb[0].mxu0
        %v635 = vpop.f32.mrb[0].mxu0
        %v636 = vpop.f32.mrb[0].mxu0
        %637 = vdwg.mxu0
        %v638 = vsel %vm370, %v633, -inf
        %639 = vmax.xlane.f32.xlu0 %v638
        %v640 = vpop.xlane.xlu0 %639
        %v641 = vsub.f32 %v633, %v640
        %v642 = vmul.f32 %v641, 1.442695
        %v643 = vpow.pop %v642
        %v644 = vsel %vm370, %v643, 0.0
        %645 = vadd.xlane.f32.xlu0 %v644
        %v646 = vpop.xlane.xlu0 %645
        %v647 = vrcp.pop %v646
        %v648 = vmul.f32 %v643, %v647
        %v649 = vpack.c.bf16 %v648, %v648
        %650 = vrot.lane.b32.xlu0 %v365, 48
        %v651 = vpop.permute.xlu0 %650
        %v653 = vsel %vm370, %v649, 0
        %v656 = vsel %vm434, %v651, 0
        %658 = vmatprep.subr.bf16.mxu0 0
        %659 = vmatpush1.bf16.msra.mxu0 %v656
        %660 = vmatprep.subr.bf16.mxu0 0
        %661 = vmatpush1.bf16.msra.mxu0 0
        %662 = vmatprep.subr.bf16.mxu0 0
        %663 = vmatpush1.bf16.msra.mxu0 0
        %664 = vmatprep.subr.bf16.mxu0 0
        %665 = vmatpush1.bf16.msra.mxu0 0
        %666 = vmatprep.subr.bf16.mxu0 0
        %667 = vmatpush1.bf16.msra.mxu0 0
        %668 = vmatprep.subr.bf16.mxu0 0
        %669 = vmatpush1.bf16.msra.mxu0 0
        %670 = vmatprep.subr.bf16.mxu0 0
        %671 = vmatpush1.bf16.msra.mxu0 0
        %672 = vmatprep.subr.bf16.mxu0 0
        %673 = vmatpush1.bf16.msra.mxu0 0
        %674 = vmatprep.subr.bf16.mxu0 0
        %675 = vmatpush1.bf16.msra.mxu0 0
        %676 = vmatprep.subr.bf16.mxu0 0
        %677 = vmatpush1.bf16.msra.mxu0 0
        %678 = vmatprep.subr.bf16.mxu0 0
        %679 = vmatpush1.bf16.msra.mxu0 0
        %680 = vmatprep.subr.bf16.mxu0 0
        %681 = vmatpush1.bf16.msra.mxu0 0
        %682 = vmatprep.subr.bf16.mxu0 0
        %683 = vmatpush1.bf16.msra.mxu0 0
        %684 = vmatprep.subr.bf16.mxu0 0
        %685 = vmatpush1.bf16.msra.mxu0 0
        %686 = vmatprep.subr.bf16.mxu0 0
        %687 = vmatpush1.bf16.msra.mxu0 0
        %688 = vmatprep.subr.bf16.mxu0 0
        %689 = vmatpush1.bf16.msra.mxu0 0
        %690 = vmatprep.mubr.bf16.mxu0 0
        %691 = vmatmul.mubr.bf16.gmra.mrb[0].mxu0 %v653
        %v692 = vpop.f32.mrb[0].mxu0
        %v693 = vadd.f32 0.0, %v692
        %v694 = vpop.f32.mrb[0].mxu0
        %v695 = vpop.f32.mrb[0].mxu0
        %v696 = vpop.f32.mrb[0].mxu0
        %697 = vdwg.mxu0
        %698 = vrot.lane.b32.xlu0 %v365, 104
        %v699 = vpop.permute.xlu0 %698
        %700 = vrot.lane.b32.xlu0 %v365, 72
        %v701 = vpop.permute.xlu0 %700
        %v703 = vsel %vm370, %v699, 0
        %v706 = vsel %vm370, %v701, 0
        %708 = vmatprep.subr.bf16.mxu0 0
        %709 = vmatpush1.bf16.xpose.msra.mxu0 %v706
        %710 = vmatprep.subr.bf16.mxu0 0
        %711 = vmatpush1.bf16.xpose.msra.mxu0 0
        %712 = vmatprep.subr.bf16.mxu0 0
        %713 = vmatpush1.bf16.xpose.msra.mxu0 0
        %714 = vmatprep.subr.bf16.mxu0 0
        %715 = vmatpush1.bf16.xpose.msra.mxu0 0
        %716 = vmatprep.subr.bf16.mxu0 0
        %717 = vmatpush1.bf16.xpose.msra.mxu0 0
        %718 = vmatprep.subr.bf16.mxu0 0
        %719 = vmatpush1.bf16.xpose.msra.mxu0 0
        %720 = vmatprep.subr.bf16.mxu0 0
        %721 = vmatpush1.bf16.xpose.msra.mxu0 0
        %722 = vmatprep.subr.bf16.mxu0 0
        %723 = vmatpush1.bf16.xpose.msra.mxu0 0
        %724 = vmatprep.subr.bf16.mxu0 0
        %725 = vmatpush1.bf16.xpose.msra.mxu0 0
        %726 = vmatprep.subr.bf16.mxu0 0
        %727 = vmatpush1.bf16.xpose.msra.mxu0 0
        %728 = vmatprep.subr.bf16.mxu0 0
        %729 = vmatpush1.bf16.xpose.msra.mxu0 0
        %730 = vmatprep.subr.bf16.mxu0 0
        %731 = vmatpush1.bf16.xpose.msra.mxu0 0
        %732 = vmatprep.subr.bf16.mxu0 0
        %733 = vmatpush1.bf16.xpose.msra.mxu0 0
        %734 = vmatprep.subr.bf16.mxu0 0
        %735 = vmatpush1.bf16.xpose.msra.mxu0 0
        %736 = vmatprep.subr.bf16.mxu0 0
        %737 = vmatpush1.bf16.xpose.msra.mxu0 0
        %738 = vmatprep.subr.bf16.mxu0 0
        %739 = vmatpush1.bf16.xpose.msra.mxu0 0
        %740 = vmatprep.mubr.bf16.mxu0 0
        %741 = vmatmul.mubr.bf16.gmra.mrb[0].mxu0 %v703
        %v742 = vpop.f32.mrb[0].mxu0
        %v743 = vadd.f32 %v366, %v742
        %v744 = vpop.f32.mrb[0].mxu0
        %v745 = vpop.f32.mrb[0].mxu0
        %v746 = vpop.f32.mrb[0].mxu0
        %747 = vdwg.mxu0
        %v748 = vsel %vm370, %v743, -inf
        %749 = vmax.xlane.f32.xlu0 %v748
        %v750 = vpop.xlane.xlu0 %749
        %v751 = vsub.f32 %v743, %v750
        %v752 = vmul.f32 %v751, 1.442695
        %v753 = vpow.pop %v752
        %v754 = vsel %vm370, %v753, 0.0
        %755 = vadd.xlane.f32.xlu0 %v754
        %v756 = vpop.xlane.xlu0 %755
        %v757 = vrcp.pop %v756
        %v758 = vmul.f32 %v753, %v757
        %v759 = vpack.c.bf16 %v758, %v758
        %760 = vrot.lane.b32.xlu0 %v365, 40
        %v761 = vpop.permute.xlu0 %760
        %v763 = vsel %vm370, %v759, 0
        %v766 = vsel %vm434, %v761, 0
        %768 = vmatprep.subr.bf16.mxu0 0
        %769 = vmatpush1.bf16.msra.mxu0 %v766
        %770 = vmatprep.subr.bf16.mxu0 0
        %771 = vmatpush1.bf16.msra.mxu0 0
        %772 = vmatprep.subr.bf16.mxu0 0
        %773 = vmatpush1.bf16.msra.mxu0 0
        %774 = vmatprep.subr.bf16.mxu0 0
        %775 = vmatpush1.bf16.msra.mxu0 0
        %776 = vmatprep.subr.bf16.mxu0 0
        %777 = vmatpush1.bf16.msra.mxu0 0
        %778 = vmatprep.subr.bf16.mxu0 0
        %779 = vmatpush1.bf16.msra.mxu0 0
        %780 = vmatprep.subr.bf16.mxu0 0
        %781 = vmatpush1.bf16.msra.mxu0 0
        %782 = vmatprep.subr.bf16.mxu0 0
        %783 = vmatpush1.bf16.msra.mxu0 0
        %784 = vmatprep.subr.bf16.mxu0 0
        %785 = vmatpush1.bf16.msra.mxu0 0
        %786 = vmatprep.subr.bf16.mxu0 0
        %787 = vmatpush1.bf16.msra.mxu0 0
        %788 = vmatprep.subr.bf16.mxu0 0
        %789 = vmatpush1.bf16.msra.mxu0 0
        %790 = vmatprep.subr.bf16.mxu0 0
        %791 = vmatpush1.bf16.msra.mxu0 0
        %792 = vmatprep.subr.bf16.mxu0 0
        %793 = vmatpush1.bf16.msra.mxu0 0
        %794 = vmatprep.subr.bf16.mxu0 0
        %795 = vmatpush1.bf16.msra.mxu0 0
        %796 = vmatprep.subr.bf16.mxu0 0
        %797 = vmatpush1.bf16.msra.mxu0 0
        %798 = vmatprep.subr.bf16.mxu0 0
        %799 = vmatpush1.bf16.msra.mxu0 0
        %800 = vmatprep.mubr.bf16.mxu0 0
        %801 = vmatmul.mubr.bf16.gmra.mrb[0].mxu0 %v763
        %v802 = vpop.f32.mrb[0].mxu0
        %v803 = vadd.f32 0.0, %v802
        %v804 = vpop.f32.mrb[0].mxu0
        %v805 = vpop.f32.mrb[0].mxu0
        %v806 = vpop.f32.mrb[0].mxu0
        %807 = vdwg.mxu0
        %809 = vrot.lane.b32.xlu0 %v583, 8
        %v810 = vpop.permute.xlu0 %809
        %813 = vrot.lane.b32.xlu0 %v693, 16
        %v814 = vpop.permute.xlu0 %813
        %817 = vrot.lane.b32.xlu0 %v803, 24
        %v818 = vpop.permute.xlu0 %817
        %v820 = vsel %vm370, %v473, %v810
        %vm821 = vcmask 130048
        %v822 = vsel %vm821, %v820, %v814
        %vm823 = vcmask 195584
        %v824 = vsel %vm823, %v822, %v818
        %v825 = vpack.c.bf16 %v824, %v824
        %v826 = vld [vmem:[#allocation7] sm:$0xf]
        %v827 = vld [vmem:[#allocation7 + $0x4] sm:$0xf]
        %v828 = vld [vmem:[#allocation7 + $0x8] sm:$0xf]
        %v829 = vld [vmem:[#allocation7 + $0xc] sm:$0xf]
        %v830 = vld [vmem:[%s4] sm:$0x1]
        %v832 = vlaneseq
        %v833 = vshrl.u32 %v832, 7
        %v834 = vsub.s32 0, %v833
        %v835 = vrot.slane %v830, %v834
        %v841 = vunpack.c.l.b16 %v826
        %v842 = vunpack.c.l.b16 %v827
        %v843 = vunpack.c.l.b16 %v828
        %v844 = vunpack.c.l.b16 %v829
        %v845 = vpack.c.b16 %v842, %v841
        %v846 = vpack.c.b16 %v844, %v843
        %v850 = vsel %vm321, %v825, 0
        %852 = vmatprep.subr.bf16.mxu0 0
        %853 = vmatpush1.bf16.msra.mxu0 %v845
        %854 = vmatprep.subr.bf16.mxu0 0
        %855 = vmatpush1.bf16.msra.mxu0 %v846
        %856 = vmatprep.subr.bf16.mxu0 0
        %857 = vmatpush1.bf16.msra.mxu0 0
        %858 = vmatprep.subr.bf16.mxu0 0
        %859 = vmatpush1.bf16.msra.mxu0 0
        %860 = vmatprep.subr.bf16.mxu0 0
        %861 = vmatpush1.bf16.msra.mxu0 0
        %862 = vmatprep.subr.bf16.mxu0 0
        %863 = vmatpush1.bf16.msra.mxu0 0
        %864 = vmatprep.subr.bf16.mxu0 0
        %865 = vmatpush1.bf16.msra.mxu0 0
        %866 = vmatprep.subr.bf16.mxu0 0
        %867 = vmatpush1.bf16.msra.mxu0 0
        %868 = vmatprep.subr.bf16.mxu0 0
        %869 = vmatpush1.bf16.msra.mxu0 0
        %870 = vmatprep.subr.bf16.mxu0 0
        %871 = vmatpush1.bf16.msra.mxu0 0
        %872 = vmatprep.subr.bf16.mxu0 0
        %873 = vmatpush1.bf16.msra.mxu0 0
        %874 = vmatprep.subr.bf16.mxu0 0
        %875 = vmatpush1.bf16.msra.mxu0 0
        %876 = vmatprep.subr.bf16.mxu0 0
        %877 = vmatpush1.bf16.msra.mxu0 0
        %878 = vmatprep.subr.bf16.mxu0 0
        %879 = vmatpush1.bf16.msra.mxu0 0
        %880 = vmatprep.subr.bf16.mxu0 0
        %881 = vmatpush1.bf16.msra.mxu0 0
        %882 = vmatprep.subr.bf16.mxu0 0
        %883 = vmatpush1.bf16.msra.mxu0 0
        %884 = vmatprep.mubr.bf16.mxu0 0
        %885 = vmatmul.mubr.bf16.gmra.mrb[0].mxu0 %v850
        %v886 = vpop.f32.mrb[0].mxu0
        %v887 = vadd.f32 %v835, %v886
        %v888 = vpop.f32.mrb[0].mxu0
        %v889 = vpop.f32.mrb[0].mxu0
        %v890 = vpop.f32.mrb[0].mxu0
        %891 = vdwg.mxu0
        %892 = vst.msk [vmem:[%s295] sm:$0xff] %vm321, %v887
        %s893 = sand.u32 %s163, 1
        %s894 = scalar_lea.sflag [#allocation4], %s893
        %s895 = sand.u32 %s163, 1
        %s896 = smul.addr %s895, 8
        %s897 = scalar_lea.vmem [#allocation8], %s896
        // Predicated region
        $region57: #{tpu_custom_call.1} parent=43 // pred_check
          %p898 = pneg %p173
        $region58: #{tpu_custom_call.1} parent=43 // pred_check_branch
          %900 = sbr.rel (%p898) target = $region60
        $region59: #{tpu_custom_call.1} parent=43 // pred_region
          %s902 = ssub.s32 128, 128
          %903 = vsyncadd %s894, %s902
          %s904 = smul.addr %s24, 128
          %s905 = scalar_lea.hbm %s6, %s904
          %s907 = sshll.u32 %s897, 4
          %s908 = int_to_ptr.vmem [resolvable:$true] %s907
          %910 = dma.vmem_to_hbm [thread:$0]  %s908, 128, %s905, %s894
        $region60: #{tpu_custom_call.1} parent=43 // pred_fallthru
          _
      $region44: #{tpu_custom_call.1} parent=5 // pred_fallthru
        _
      %p911 = scmp.le.s32.totalorder 2, %s19
      // Predicated region
      $region61: #{tpu_custom_call.1} parent=5 // pred_check
        %p912 = pneg %p911
      $region62: #{tpu_custom_call.1} parent=5 // pred_check_branch
        %914 = sbr.rel (%p912) target = $region64
      $region63: #{tpu_custom_call.1} parent=5 // pred_region
        %s915 = ssub.s32 %s19, 2
        // Predicated region
        $region65: #{tpu_custom_call.1} parent=63 // pred_check
          %p916 = pneg %p179
        $region66: #{tpu_custom_call.1} parent=63 // pred_check_branch
          %918 = sbr.rel (%p916) target = $region68
        $region67: #{tpu_custom_call.1} parent=63 // pred_region
          %s919 = sand.u32 %s164, 1
          %s920 = scalar_lea.sflag [#allocation4], %s919
          %s921 = sand.u32 %s164, 1
          %s922 = smul.addr %s921, 8
          %s923 = scalar_lea.vmem [#allocation8], %s922
          %924 = dma.done %s920, 128
        $region68: #{tpu_custom_call.1} parent=63 // pred_fallthru
          _
      $region64: #{tpu_custom_call.1} parent=5 // pred_fallthru
        _
    $region6: #{tpu_custom_call.1} parent=1 // loop_footer
      %s23 = sadd.s32 1, %s19
    $region7: #{tpu_custom_call.1} parent=1 // loop_footer_branch
      %18 = sbr.rel target = $region3
    $region8: #{tpu_custom_call.1} parent=1 // loop_exit
      _
    %925 = vsyncpa [#allocation3], 1
    %s926 = scalar_lea.sflag [#allocation3], 1
    %927 = vsyncpa %s926, 1
    %928 = vsyncpa [#allocation6], 1
    %929 = vsyncpa [#allocation4], 1
    %s930 = scalar_lea.sflag [#allocation4], 1
    %931 = vsyncpa %s930, 1

</llo_original>
